<compile_context>
chip_gen: v7x
topology: tpu7x:2x2x1
jax: 0.10.0
libtpu: 0.0.40
codegen_flags: <defaults>
</compile_context>

<pallas_src>
import functools

import jax
import jax.numpy as jnp
from jax.experimental import pallas as pl
from jax.experimental.pallas import tpu as pltpu


def _residual_dense_kernel(x_ref, w_ref, b_ref, o_ref):
    # x_ref: (TM, D) f32   w_ref: (D, D) bf16   b_ref: (1, D) f32   o_ref: (TM, D)
    x = x_ref[...]                               # f32, kept exact for the residual
    fn_out = jnp.dot(
        x.astype(jnp.bfloat16),                  # bf16 MXU inputs ...
        w_ref[...],
        preferred_element_type=jnp.float32,      # ... f32 accumulation
    )
    fn_out = fn_out + b_ref[...]                 # bias in f32 (VPU)
    o_ref[...] = (fn_out + x).astype(o_ref.dtype)  # residual add in f32, cast last


def _round_up(a, m):
    return ((a + m - 1) // m) * m


def _round_down(a, m):
    return (a // m) * m


def _pick_tm(m, tm_target):
    """Row-tile size: as large as possible (kernel is HBM-bound), but keep
    >= ~8 grid steps so each TensorCore still double-buffers after megacore
    sharding on v7x.  Always a multiple of 8 (sublane) and never > problem."""
    tm_target = max(8, _round_down(tm_target, 8))
    if m < 64:
        return max(8, _round_up(m, 8))
    tm_pipeline = max(8, _round_down(m // 8, 8))   # -> >= 8 grid steps
    return min(tm_target, tm_pipeline)


def _vmem_limit_bytes(need_bytes):
    """Generation-aware VMEM cap (v7x: 64 MiB/TC; v5e/v6e: 128 MiB)."""
    try:
        phys = pltpu.get_tpu_info().vmem_capacity_bytes
    except Exception:
        phys = 64 * 1024 * 1024                  # conservative (v7x) fallback
    cap = (phys * 3) // 4                        # leave compiler-scratch headroom
    return int(min(cap, max(32 * 1024 * 1024, 2 * need_bytes)))


@functools.partial(jax.jit, static_argnames=("tm",))
def residual_apply(x, w, b, *, tm=1024):
    """Compute fn(x) + x with fn(x) = x @ w + b, fused in one Pallas kernel.

    x: (B, N, D) float32
    w: (D, D)    float32 (cast to bf16 for the MXU)
    b: (D,)      float32
    """
    B, N, D = x.shape
    M = B * N
    x2d = x.reshape(M, D)

    tm = _pick_tm(M, tm)
    grid = (pl.cdiv(M, tm),)          # ragged last block is masked; no pad/slice

    w_bf = w.astype(jnp.bfloat16)     # halve W DMA + VMEM (fuses under jit)
    b2d = b.reshape(1, D).astype(jnp.float32)

    # VMEM: 2x-buffered x tile + 2x-buffered out tile (f32) + 1x bf16 W + 1x f32 b.
    need_bytes = 2 * (4 * tm * D) + 2 * (4 * tm * D) + 2 * D * D + 4 * D
    vmem_limit = _vmem_limit_bytes(need_bytes)

    out2d = pl.pallas_call(
        _residual_dense_kernel,
        out_shape=jax.ShapeDtypeStruct((M, D), x.dtype),
        grid_spec=pltpu.PrefetchScalarGridSpec(
            num_scalar_prefetch=0,
            grid=grid,
            in_specs=[
                pl.BlockSpec((tm, D), lambda i: (i, 0)),        # x tile, streamed
                pl.BlockSpec((D, D), lambda i: (0, 0),
                             pipeline_mode=pl.Buffered(1)),     # W resident, 1 buffer
                pl.BlockSpec((1, D), lambda i: (0, 0),
                             pipeline_mode=pl.Buffered(1)),     # b resident, 1 buffer
            ],
            out_specs=pl.BlockSpec((tm, D), lambda i: (i, 0)),
        ),
        compiler_params=pltpu.CompilerParams(
            dimension_semantics=("parallel",),                  # megacore split on v7x
            vmem_limit_bytes=vmem_limit,
        ),
        cost_estimate=pl.CostEstimate(
            flops=2 * M * D * D + M * D,
            bytes_accessed=2 * 4 * M * D + 2 * D * D + 4 * D,   # true (unpadded) M
            transcendentals=0,
        ),
    )(x2d, w_bf, b2d)

    return out2d.reshape(B, N, D)


if __name__ == "__main__":
    key = jax.random.PRNGKey(0)
    kx, kw, kb = jax.random.split(key, 3)

    # Small, lane-dense demo shapes: D=128 fills the lane axis; M = B*N = 256
    # gives an 8-step pipelined grid after the tm clamp (>= 4 steps/TC on v7x).
    B, N, D = 2, 128, 128
    x = jax.random.normal(kx, (B, N, D), dtype=jnp.float32)
    # Deterministic parameters for the wrapped fn (a dense layer).
    w = jax.random.normal(kw, (D, D), dtype=jnp.float32) * 0.02
    b = jax.random.normal(kb, (D,), dtype=jnp.float32) * 0.01

    out = residual_apply(x, w, b)
    jax.block_until_ready(out)

    # Pure-JAX f32 reference of Residual semantics: fn(x) + x.
    # Tolerance loosened vs. pure-f32 because the matmul runs in bf16 (f32 acc).
    ref = (jnp.einsum("bnd,de->bne", x, w) + b) + x
    assert out.shape == x.shape and out.dtype == x.dtype
    assert jnp.allclose(out, ref, atol=2e-2, rtol=2e-2), (
        float(jnp.max(jnp.abs(out - ref)))
    )

    print("KERNEL_OK")
</pallas_src>

<mosaic_0001>
module attributes {stable_mosaic.version = 11 : i64} {
  func.func @_residual_dense_kernel(%arg0: i32, %arg1: memref<32x128xf32, #tpu.memory_space<vmem>>, %arg2: memref<128x128xbf16, #tpu.memory_space<vmem>>, %arg3: memref<1x128xf32, #tpu.memory_space<vmem>>, %arg4: memref<32x128xf32, #tpu.memory_space<vmem>>) attributes {dimension_semantics = [#tpu.dimension_semantics<parallel>], iteration_bounds = array<i64: 8>, scalar_prefetch = 0 : i64, scratch_operands = 0 : i64, tpu.core_type = #tpu.core_type<tc>, window_params = [{transform_indices = @transform_0, window_bounds = array<i64: 32, 128>}, {pipeline_mode = #tpu.pipeline_mode<synchronous>, transform_indices = @transform_1, window_bounds = array<i64: 128, 128>}, {pipeline_mode = #tpu.pipeline_mode<synchronous>, transform_indices = @transform_2, window_bounds = array<i64: 1, 128>}, {transform_indices = @transform_3, window_bounds = array<i64: 32, 128>}]} {
    %c0 = arith.constant 0 : index
    %c0_0 = arith.constant 0 : index
    %0 = vector.load %arg1[%c0, %c0_0] : memref<32x128xf32, #tpu.memory_space<vmem>>, vector<32x128xf32>
    %1 = arith.truncf %0 : vector<32x128xf32> to vector<32x128xbf16>
    %c0_1 = arith.constant 0 : index
    %c0_2 = arith.constant 0 : index
    %2 = vector.load %arg2[%c0_1, %c0_2] : memref<128x128xbf16, #tpu.memory_space<vmem>>, vector<128x128xbf16>
    %cst = arith.constant dense<0.000000e+00> : vector<32x128xf32>
    %3 = tpu.matmul %1, %2, %cst {dimension_numbers = #tpu.dot_dimension_numbers<[1], [0], [0], [1], [0, 0, 1, 1], [], []>} : vector<32x128xbf16>, vector<128x128xbf16>, vector<32x128xf32> -> vector<32x128xf32>
    %c0_3 = arith.constant 0 : index
    %c0_4 = arith.constant 0 : index
    %4 = vector.load %arg3[%c0_3, %c0_4] : memref<1x128xf32, #tpu.memory_space<vmem>>, vector<1x128xf32>
    %5 = vector.broadcast %4 : vector<1x128xf32> to vector<32x128xf32>
    %6 = arith.addf %3, %5 : vector<32x128xf32>
    %7 = arith.addf %6, %0 : vector<32x128xf32>
    %c0_5 = arith.constant 0 : index
    %c0_6 = arith.constant 0 : index
    %8 = vector.load %arg4[%c0_5, %c0_6] : memref<32x128xf32, #tpu.memory_space<vmem>>, vector<32x128xf32>
    tpu.vector_store %arg4[%c0_5, %c0_6], %7 {strides = array<i32>} : memref<32x128xf32, #tpu.memory_space<vmem>>, vector<32x128xf32>,
    return
  }
  func.func @transform_0(%arg0: i32) -> (i32, i32) {
    %c0_i32 = arith.constant 0 : i32
    %c0_i32_0 = arith.constant 0 : i32
    return %arg0, %c0_i32 : i32, i32
  }
  func.func @transform_1(%arg0: i32) -> (i32, i32) {
    %c0_i32 = arith.constant 0 : i32
    %c0_i32_0 = arith.constant 0 : i32
    %c0_i32_1 = arith.constant 0 : i32
    return %c0_i32, %c0_i32_0 : i32, i32
  }
  func.func @transform_2(%arg0: i32) -> (i32, i32) {
    %c0_i32 = arith.constant 0 : i32
    %c0_i32_0 = arith.constant 0 : i32
    %c0_i32_1 = arith.constant 0 : i32
    return %c0_i32, %c0_i32_0 : i32, i32
  }
  func.func @transform_3(%arg0: i32) -> (i32, i32) {
    %c0_i32 = arith.constant 0 : i32
    %c0_i32_0 = arith.constant 0 : i32
    return %arg0, %c0_i32 : i32, i32
  }
}

</mosaic_0001>

<llo_original>
// kernel: residual_apply.1
$region0: #{residual_apply.1}
  #allocation0 [shape = 'u32[]', space=smem, size = 0x4, offset = 0x4, fixed_abs, tag = 'smem constant byte address 0x4 - core index']
  #allocation1 [shape = 'u32[144,128]{1,0:T(1,128)}', space=vmem, size = 0x12000, scoped, tag = 'internal scratch']
  %s0 = inlined_call_operand.hbm [shape: f32[256,128], index: 0, kind: input, shape index: {}]
  %s1 = inlined_call_operand.vmem [shape: bf16[128,128], index: 1, kind: input, shape index: {}]
  %s2 = inlined_call_operand.vmem [shape: f32[1,128], index: 2, kind: input, shape index: {}]
  %s3 = inlined_call_operand.hbm [shape: f32[256,128], index: 3, kind: output, shape index: {}]
  %s4 = sld [smem:[#allocation0]]
  $region49: #{residual_apply.1} parent=0
    _
  %s6 = ssub.s32 1, %s4
  %s7 = scalar_select 0, %s6, %s4
  $region1: #{residual_apply.1} parent=0
    #allocation2 [shape = 'u8[32768]{0}', space=vmem, size = 0x8000, scoped, tag = 'input window, operand 0']
    #allocation3 [shape = 's32[2]{0}', space=sflag, size = 0x8, scoped, tag = 'scoped memory for residual_apply.1']
    #allocation4 [shape = 's32[2]{0}', space=sflag, size = 0x8, scoped, tag = 'scoped memory for residual_apply.1']
    #allocation5 [shape = 'u8[32768]{0}', space=vmem, size = 0x8000, scoped, tag = 'output window, operand 0']
    %8 = vsyncpa [#allocation3], 0
    %s9 = scalar_lea.sflag [#allocation3], 1
    %10 = vsyncpa %s9, 0
    %11 = vsyncpa [#allocation4], 0
    %s12 = scalar_lea.sflag [#allocation4], 1
    %13 = vsyncpa %s12, 0
    loop: start=0, step=1, limit=10
    $region2: #{residual_apply.1} parent=1 // loop_pre_header
      _
    $region3: #{residual_apply.1} parent=1 // loop_header
      %s15 = sphi 0, %s19
      %p16 = scmp.ge.s32.totalorder %s15, 10
      %s25 = sphi 0, %s27
      %s28 = sphi 0, %s25
      %s29 = sphi 0, %s28
      %s45 = sphi 0, %s29
      %s49 = sphi 0, %s49
      %s51 = sphi 0, %s49
      %s52 = sphi 0, %s51
      %s66 = sphi 0, %s52
      %s70 = sphi 0, %s70
      %s72 = sphi 0, %s70
      %s73 = sphi 0, %s72
      %s87 = sphi 0, %s73
      %s93 = sphi 0, %s95
      %s96 = sphi 0, %s93
      %s97 = sphi 0, %s96
      %s113 = sphi 0, %s97
    $region4: #{residual_apply.1} parent=1 // loop_header_branch
      %18 = sbr.rel (%p16) target = $region8
    $region5: #{residual_apply.1} parent=1 // loop_body
      %s20 = ssub.s32 %s15, 1
      %s21 = ssub.s32 %s15, 2
      %s22 = sadd.s32 %s15, 1
      %s23 = ssub.s32 %s15, %s22
      %p24 = scmp.eq.s32.totalorder %s23, 0
      %s26 = sadd.s32 %s25, 1
      %s27 = scalar_select %p24, %s25, %s26
      %p30 = pneg %p24
      %p31 = scmp.eq.s32.totalorder %s15, 7
      %p32 = por %p30, %p31
      %p33 = scmp.ne.s32.totalorder %s25, %s28
      %p34 = scmp.eq.s32.totalorder %s15, 0
      %p35 = por %p33, %p34
      %p36 = scmp.ne.s32.totalorder %s25, %s28
      %p37 = scmp.eq.s32.totalorder %s20, 7
      %p38 = por %p36, %p37
      %p39 = scmp.ne.s32.totalorder %s28, %s29
      %p40 = scmp.eq.s32.totalorder %s20, 0
      %p41 = por %p39, %p40
      %p42 = scmp.ne.s32.totalorder %s28, %s29
      %p43 = scmp.eq.s32.totalorder %s21, 7
      %p44 = por %p42, %p43
      %p46 = scmp.ne.s32.totalorder %s29, %s45
      %p47 = scmp.eq.s32.totalorder %s21, 0
      %p48 = por %p46, %p47
      %s50 = sadd.s32 %s49, 1
      %p53 = scmp.eq.s32.totalorder %s15, 7
      %p54 = scmp.ne.s32.totalorder %s49, %s51
      %p55 = scmp.eq.s32.totalorder %s15, 0
      %p56 = por %p54, %p55
      %p57 = scmp.ne.s32.totalorder %s49, %s51
      %p58 = scmp.eq.s32.totalorder %s20, 7
      %p59 = por %p57, %p58
      %p60 = scmp.ne.s32.totalorder %s51, %s52
      %p61 = scmp.eq.s32.totalorder %s20, 0
      %p62 = por %p60, %p61
      %p63 = scmp.ne.s32.totalorder %s51, %s52
      %p64 = scmp.eq.s32.totalorder %s21, 7
      %p65 = por %p63, %p64
      %p67 = scmp.ne.s32.totalorder %s52, %s66
      %p68 = scmp.eq.s32.totalorder %s21, 0
      %p69 = por %p67, %p68
      %s71 = sadd.s32 %s70, 1
      %p74 = scmp.eq.s32.totalorder %s15, 7
      %p75 = scmp.ne.s32.totalorder %s70, %s72
      %p76 = scmp.eq.s32.totalorder %s15, 0
      %p77 = por %p75, %p76
      %p78 = scmp.ne.s32.totalorder %s70, %s72
      %p79 = scmp.eq.s32.totalorder %s20, 7
      %p80 = por %p78, %p79
      %p81 = scmp.ne.s32.totalorder %s72, %s73
      %p82 = scmp.eq.s32.totalorder %s20, 0
      %p83 = por %p81, %p82
      %p84 = scmp.ne.s32.totalorder %s72, %s73
      %p85 = scmp.eq.s32.totalorder %s21, 7
      %p86 = por %p84, %p85
      %p88 = scmp.ne.s32.totalorder %s73, %s87
      %p89 = scmp.eq.s32.totalorder %s21, 0
      %p90 = por %p88, %p89
      %s91 = ssub.s32 %s15, %s22
      %p92 = scmp.eq.s32.totalorder %s91, 0
      %s94 = sadd.s32 %s93, 1
      %s95 = scalar_select %p92, %s93, %s94
      %p98 = pneg %p92
      %p99 = scmp.eq.s32.totalorder %s15, 7
      %p100 = por %p98, %p99
      %p101 = scmp.ne.s32.totalorder %s93, %s96
      %p102 = scmp.eq.s32.totalorder %s15, 0
      %p103 = por %p101, %p102
      %p104 = scmp.ne.s32.totalorder %s93, %s96
      %p105 = scmp.eq.s32.totalorder %s20, 7
      %p106 = por %p104, %p105
      %p107 = scmp.ne.s32.totalorder %s96, %s97
      %p108 = scmp.eq.s32.totalorder %s20, 0
      %p109 = por %p107, %p108
      %p110 = scmp.ne.s32.totalorder %s96, %s97
      %p111 = scmp.eq.s32.totalorder %s21, 7
      %p112 = por %p110, %p111
      %p114 = scmp.ne.s32.totalorder %s97, %s113
      %p115 = scmp.eq.s32.totalorder %s21, 0
      %p116 = por %p114, %p115
      %p117 = scmp.le.s32.totalorder 1, %s15
      %p118 = scmp.lt.s32.totalorder %s15, 9
      %p119 = pnand %p117, %p118
      %p120 = pneg %p119
      // Predicated region
      $region9: #{residual_apply.1} parent=5 // pred_check
        _
      $region10: #{residual_apply.1} parent=5 // pred_check_branch
        %122 = sbr.rel (%p119) target = $region12
      $region11: #{residual_apply.1} parent=5 // pred_region
        %s123 = ssub.s32 %s15, 1
        // Predicated region
        $region13: #{residual_apply.1} parent=11 // pred_check
          %p124 = pneg %p62
        $region14: #{residual_apply.1} parent=11 // pred_check_branch
          %126 = sbr.rel (%p124) target = $region16
        $region15: #{residual_apply.1} parent=11 // pred_region
          _
        $region16: #{residual_apply.1} parent=11 // pred_fallthru
          _
        // Predicated region
        $region17: #{residual_apply.1} parent=11 // pred_check
          %p127 = pneg %p83
        $region18: #{residual_apply.1} parent=11 // pred_check_branch
          %129 = sbr.rel (%p127) target = $region20
        $region19: #{residual_apply.1} parent=11 // pred_region
          _
        $region20: #{residual_apply.1} parent=11 // pred_fallthru
          _
      $region12: #{residual_apply.1} parent=5 // pred_fallthru
        _
      %p130 = scmp.lt.s32.totalorder %s15, 8
      // Predicated region
      $region21: #{residual_apply.1} parent=5 // pred_check
        %p131 = pneg %p130
      $region22: #{residual_apply.1} parent=5 // pred_check_branch
        %133 = sbr.rel (%p131) target = $region24
      $region23: #{residual_apply.1} parent=5 // pred_region
        // Predicated region
        $region25: #{residual_apply.1} parent=23 // pred_check
          %p134 = pneg %p35
        $region26: #{residual_apply.1} parent=23 // pred_check_branch
          %136 = sbr.rel (%p134) target = $region28
        $region27: #{residual_apply.1} parent=23 // pred_region
          %s137 = sand.u32 %s25, 1
          %s138 = scalar_lea.sflag [#allocation3], %s137
          %s139 = sand.u32 %s25, 1
          %s140 = smul.addr %s139, 32
          %s141 = scalar_lea.vmem [#allocation2], %s140
          %s142 = smul.u32 4, %s15
          %s144 = ssub.s32 512, 512
          %145 = vsyncadd %s138, %s144
          %s146 = smul.addr %s142, 128
          %s147 = scalar_lea.hbm %s0, %s146
          %s148 = sshll.u32 %s141, 4
          %s149 = int_to_ptr.vmem [resolvable:$true] %s148
          %154 = dma.hbm_to_vmem [thread:$0]  %s147, 512, %s149, %s138, 128, 128, 8
        $region28: #{residual_apply.1} parent=23 // pred_fallthru
          _
      $region24: #{residual_apply.1} parent=5 // pred_fallthru
        _
      %p155 = scmp.le.s32.totalorder 1, %s15
      %p156 = scmp.lt.s32.totalorder %s15, 9
      %p157 = pnand %p155, %p156
      %p158 = pneg %p157
      // Predicated region
      $region29: #{residual_apply.1} parent=5 // pred_check
        _
      $region30: #{residual_apply.1} parent=5 // pred_check_branch
        %160 = sbr.rel (%p157) target = $region32
      $region31: #{residual_apply.1} parent=5 // pred_region
        %s161 = ssub.s32 %s15, 1
        %s162 = sand.u32 %s28, 1
        %s163 = scalar_lea.sflag [#allocation3], %s162
        %s164 = sand.u32 %s28, 1
        %s165 = smul.addr %s164, 32
        %s166 = scalar_lea.vmem [#allocation2], %s165
        // Predicated region
        $region33: #{residual_apply.1} parent=31 // pred_check
          %p167 = pneg %p41
        $region34: #{residual_apply.1} parent=31 // pred_check_branch
          %169 = sbr.rel (%p167) target = $region36
        $region35: #{residual_apply.1} parent=31 // pred_region
          %170 = dma.done %s163, 512
        $region36: #{residual_apply.1} parent=31 // pred_fallthru
          _
        %s171 = sand.u32 %s28, 1
        %s172 = scalar_lea.sflag [#allocation3], %s171
        %s173 = sand.u32 %s28, 1
        %s174 = smul.addr %s173, 32
        %s175 = scalar_lea.vmem [#allocation2], %s174
        %p176 = pneg %p41
        %p177 = pneg %p38
        %p178 = pneg %p62
        %p179 = pneg %p59
        %p180 = pneg %p83
        %p181 = pneg %p80
        %p182 = pneg %p109
        %p183 = pneg %p106
        %s184 = sand.u32 %s96, 1
        %s185 = scalar_lea.sflag [#allocation4], %s184
        %s186 = sand.u32 %s96, 1
        %s187 = smul.addr %s186, 32
        %s188 = scalar_lea.vmem [#allocation5], %s187
        %s189 = smul.u32 4, %s20
        %s190 = smul.u32 4, %s20
        %v192 = vld [vmem:[%s166] sm:$0xff]
        %v193 = vld [vmem:[%s166 + $0x8] sm:$0xff]
        %v194 = vld [vmem:[%s166 + $0x10] sm:$0xff]
        %v195 = vld [vmem:[%s166 + $0x18] sm:$0xff]
        %v196 = vpack.c.bf16 %v193, %v192
        %v197 = vpack.c.bf16 %v195, %v194
        %v198 = vld [vmem:[%s1] sm:$0xf]
        %v199 = vld [vmem:[%s1 + $0x4] sm:$0xf]
        %v200 = vld [vmem:[%s1 + $0x8] sm:$0xf]
        %v201 = vld [vmem:[%s1 + $0xc] sm:$0xf]
        %v202 = vld [vmem:[%s1 + $0x10] sm:$0xf]
        %v203 = vld [vmem:[%s1 + $0x14] sm:$0xf]
        %v204 = vld [vmem:[%s1 + $0x18] sm:$0xf]
        %v205 = vld [vmem:[%s1 + $0x1c] sm:$0xf]
        %v206 = vld [vmem:[%s1 + $0x20] sm:$0xf]
        %v207 = vld [vmem:[%s1 + $0x24] sm:$0xf]
        %v208 = vld [vmem:[%s1 + $0x28] sm:$0xf]
        %v209 = vld [vmem:[%s1 + $0x2c] sm:$0xf]
        %v210 = vld [vmem:[%s1 + $0x30] sm:$0xf]
        %v211 = vld [vmem:[%s1 + $0x34] sm:$0xf]
        %v212 = vld [vmem:[%s1 + $0x38] sm:$0xf]
        %v213 = vld [vmem:[%s1 + $0x3c] sm:$0xf]
        %v214 = vld [vmem:[%s2] sm:$0x1]
        %v216 = vlaneseq
        %v217 = vshrl.u32 %v216, 7
        %v218 = vsub.s32 0, %v217
        %v219 = vrot.slane %v214, %v218
        %v237 = vunpack.c.l.b16 %v198
        %v238 = vunpack.c.l.b16 %v199
        %v239 = vunpack.c.l.b16 %v200
        %v240 = vunpack.c.l.b16 %v201
        %v241 = vunpack.c.l.b16 %v202
        %v242 = vunpack.c.l.b16 %v203
        %v243 = vunpack.c.l.b16 %v204
        %v244 = vunpack.c.l.b16 %v205
        %v245 = vunpack.c.l.b16 %v206
        %v246 = vunpack.c.l.b16 %v207
        %v247 = vunpack.c.l.b16 %v208
        %v248 = vunpack.c.l.b16 %v209
        %v249 = vunpack.c.l.b16 %v210
        %v250 = vunpack.c.l.b16 %v211
        %v251 = vunpack.c.l.b16 %v212
        %v252 = vunpack.c.l.b16 %v213
        %v253 = vpack.c.b16 %v238, %v237
        %v254 = vpack.c.b16 %v240, %v239
        %v255 = vpack.c.b16 %v242, %v241
        %v256 = vpack.c.b16 %v244, %v243
        %v257 = vpack.c.b16 %v246, %v245
        %v258 = vpack.c.b16 %v248, %v247
        %v259 = vpack.c.b16 %v250, %v249
        %v260 = vpack.c.b16 %v252, %v251
        %269 = vmatprep.subr.bf16.mxu0 0
        %270 = vmatpush1.bf16.msra.mxu0 %v253
        %271 = vmatprep.subr.bf16.mxu0 0
        %272 = vmatpush1.bf16.msra.mxu0 %v254
        %273 = vmatprep.subr.bf16.mxu0 0
        %274 = vmatpush1.bf16.msra.mxu0 %v255
        %275 = vmatprep.subr.bf16.mxu0 0
        %276 = vmatpush1.bf16.msra.mxu0 %v256
        %277 = vmatprep.subr.bf16.mxu0 0
        %278 = vmatpush1.bf16.msra.mxu0 %v257
        %279 = vmatprep.subr.bf16.mxu0 0
        %280 = vmatpush1.bf16.msra.mxu0 %v258
        %281 = vmatprep.subr.bf16.mxu0 0
        %282 = vmatpush1.bf16.msra.mxu0 %v259
        %283 = vmatprep.subr.bf16.mxu0 0
        %284 = vmatpush1.bf16.msra.mxu0 %v260
        %285 = vmatprep.subr.bf16.mxu0 0
        %286 = vmatpush1.bf16.msra.mxu0 0
        %287 = vmatprep.subr.bf16.mxu0 0
        %288 = vmatpush1.bf16.msra.mxu0 0
        %289 = vmatprep.subr.bf16.mxu0 0
        %290 = vmatpush1.bf16.msra.mxu0 0
        %291 = vmatprep.subr.bf16.mxu0 0
        %292 = vmatpush1.bf16.msra.mxu0 0
        %293 = vmatprep.subr.bf16.mxu0 0
        %294 = vmatpush1.bf16.msra.mxu0 0
        %295 = vmatprep.subr.bf16.mxu0 0
        %296 = vmatpush1.bf16.msra.mxu0 0
        %297 = vmatprep.subr.bf16.mxu0 0
        %298 = vmatpush1.bf16.msra.mxu0 0
        %299 = vmatprep.subr.bf16.mxu0 0
        %300 = vmatpush1.bf16.msra.mxu0 0
        %301 = vmatprep.mubr.bf16.mxu0 0
        %302 = vmatmul.mubr.bf16.gmra.mrb[0].mxu0 %v196
        %v303 = vpop.f32.mrb[0].mxu0
        %v304 = vadd.f32 %v219, %v303
        %v305 = vpop.f32.mrb[0].mxu0
        %v306 = vpop.f32.mrb[0].mxu0
        %v307 = vadd.f32 %v219, %v306
        %v308 = vpop.f32.mrb[0].mxu0
        %309 = vmatprep.mubr.bf16.mxu0 0
        %310 = vmatmul.mubr.bf16.gmra.mrb[0].mxu0 %v197
        %v311 = vpop.f32.mrb[0].mxu0
        %v312 = vadd.f32 %v219, %v311
        %v313 = vpop.f32.mrb[0].mxu0
        %v314 = vpop.f32.mrb[0].mxu0
        %v315 = vadd.f32 %v219, %v314
        %v316 = vpop.f32.mrb[0].mxu0
        %317 = vdwg.mxu0
        %v318 = vadd.f32 %v304, %v192
        %v319 = vadd.f32 %v307, %v193
        %v320 = vadd.f32 %v312, %v194
        %v321 = vadd.f32 %v315, %v195
        %322 = vst [vmem:[%s188] sm:$0xff] %v318
        %323 = vst [vmem:[%s188 + $0x8] sm:$0xff] %v319
        %324 = vst [vmem:[%s188 + $0x10] sm:$0xff] %v320
        %325 = vst [vmem:[%s188 + $0x18] sm:$0xff] %v321
        %s326 = sand.u32 %s96, 1
        %s327 = scalar_lea.sflag [#allocation4], %s326
        %s328 = sand.u32 %s96, 1
        %s329 = smul.addr %s328, 32
        %s330 = scalar_lea.vmem [#allocation5], %s329
        // Predicated region
        $region37: #{residual_apply.1} parent=31 // pred_check
          %p331 = pneg %p106
        $region38: #{residual_apply.1} parent=31 // pred_check_branch
          %333 = sbr.rel (%p331) target = $region40
        $region39: #{residual_apply.1} parent=31 // pred_region
          %s334 = smul.u32 4, %s20
          %s336 = ssub.s32 512, 512
          %337 = vsyncadd %s327, %s336
          %s338 = smul.addr %s334, 128
          %s339 = scalar_lea.hbm %s3, %s338
          %s340 = sshll.u32 %s330, 4
          %s341 = int_to_ptr.vmem [resolvable:$true] %s340
          %346 = dma.vmem_to_hbm [thread:$0]  %s341, 512, %s339, %s327, 128, 128, 8
        $region40: #{residual_apply.1} parent=31 // pred_fallthru
          _
      $region32: #{residual_apply.1} parent=5 // pred_fallthru
        _
      %p347 = scmp.le.s32.totalorder 2, %s15
      // Predicated region
      $region41: #{residual_apply.1} parent=5 // pred_check
        %p348 = pneg %p347
      $region42: #{residual_apply.1} parent=5 // pred_check_branch
        %350 = sbr.rel (%p348) target = $region44
      $region43: #{residual_apply.1} parent=5 // pred_region
        %s351 = ssub.s32 %s15, 2
        // Predicated region
        $region45: #{residual_apply.1} parent=43 // pred_check
          %p352 = pneg %p112
        $region46: #{residual_apply.1} parent=43 // pred_check_branch
          %354 = sbr.rel (%p352) target = $region48
        $region47: #{residual_apply.1} parent=43 // pred_region
          %s355 = sand.u32 %s97, 1
          %s356 = scalar_lea.sflag [#allocation4], %s355
          %s357 = sand.u32 %s97, 1
          %s358 = smul.addr %s357, 32
          %s359 = scalar_lea.vmem [#allocation5], %s358
          %360 = dma.done %s356, 512
        $region48: #{residual_apply.1} parent=43 // pred_fallthru
          _
      $region44: #{residual_apply.1} parent=5 // pred_fallthru
        _
    $region6: #{residual_apply.1} parent=1 // loop_footer
      %s19 = sadd.s32 1, %s15
    $region7: #{residual_apply.1} parent=1 // loop_footer_branch
      %14 = sbr.rel target = $region3
    $region8: #{residual_apply.1} parent=1 // loop_exit
      _
    %361 = vsyncpa [#allocation3], 1
    %s362 = scalar_lea.sflag [#allocation3], 1
    %363 = vsyncpa %s362, 1
    %364 = vsyncpa [#allocation4], 1
    %s365 = scalar_lea.sflag [#allocation4], 1
    %366 = vsyncpa %s365, 1

</llo_original>
